<compile_context>
chip_gen: v6e
topology: v6e:2x2x1
jax: 0.10.0
libtpu: 0.0.40
codegen_flags: <defaults>
</compile_context>

<pallas_src>
import jax
import jax.numpy as jnp
from jax.experimental import pallas as pl
from jax.experimental.pallas import tpu as pltpu


def _pos_enc_kernel(x_ref, pe_ref, o_ref):
    """o = x + PE on one (bt, tr, width) tile; pe (tr, width) broadcasts over bt."""
    o_ref[...] = (x_ref[...].astype(jnp.float32) + pe_ref[...]).astype(o_ref.dtype)


def _hw_budget():
    """(block_cap_bytes, vmem_limit_bytes), tuned per TPU generation."""
    try:
        vmem_bytes = int(pltpu.get_tpu_info().vmem_capacity_bytes)
    except Exception:
        vmem_bytes = 64 * 1024 * 1024  # unknown / interpret: assume small-VMEM part
    if vmem_bytes >= 96 * 1024 * 1024:      # v5e / v6e: 128 MiB physical VMEM
        return 4 * 1024 * 1024, 64 * 1024 * 1024
    # v7x (64 MiB VMEM shared by 2 cores) or unknown: stay conservative.
    return 2 * 1024 * 1024, 32 * 1024 * 1024


def _choose_view(S, D):
    """(rows, width) view of one (S, D) slab with a lane-dense last dim."""
    total = S * D
    if D % 128 == 0:
        return S, D
    if total % 128 == 0:
        return total // 128, 128
    # Odd shapes: widest divisor of S*D that fits in 128 lanes; fall back to
    # the natural (S, D) view if that divisor is uselessly narrow.
    best = max((w for w in range(1, 129) if total % w == 0), default=1)
    if best >= min(D, 64):
        return total // best, best
    return S, D


def _choose_tiles(B, rows, width, itemsize, cap_bytes):
    """(bt, tr): batch / row tile sizes keeping one x block under cap_bytes."""
    sub = 8 if itemsize >= 4 else (16 if itemsize == 2 else 32)
    slab_bytes = rows * width * itemsize
    if slab_bytes <= cap_bytes:
        # Whole per-batch slab fits in one block: fuse batch elements so small
        # shapes are not per-grid-step-overhead bound.
        tr = rows
        bt = int(min(B, max(1, cap_bytes // max(1, slab_bytes))))
        if bt >= B and B >= 2:
            bt = -(-B // 2)  # keep >= 2 grid steps so the 2nd core (v7x) has work
    else:
        bt = 1
        tr = (cap_bytes // max(1, width * itemsize)) // sub * sub
        tr = int(min(rows, max(sub, tr)))
    return bt, tr


def _build_pe(S, D):
    """(S, D) f32 PE, exactly mirroring the PyTorch/numpy reference formula."""
    pos = jnp.arange(S, dtype=jnp.float32)[:, None]
    d_f = jnp.arange(D, dtype=jnp.float32)[None, :]
    d_i = jnp.arange(D)[None, :]
    angle = pos / jnp.power(jnp.float32(10000.0), 2.0 * d_f / jnp.float32(D))
    return jnp.where(d_i % 2 == 0, jnp.sin(angle), jnp.cos(angle))


def positional_encoding(x):
    """x: (batch, seq_len, dim) -- same layout as the PyTorch module."""
    B, S, D = x.shape
    rows, width = _choose_view(S, D)
    cap_bytes, vmem_limit = _hw_budget()
    bt, tr = _choose_tiles(B, rows, width, x.dtype.itemsize, cap_bytes)

    x_view = x.reshape(B, rows, width)
    pe_view = _build_pe(S, D).reshape(rows, width)   # tiny f32 table

    # Batch is the innermost grid axis: the PE block index ignores it, so the
    # PE tile is DMA'd once per row tile and reused for every batch element.
    grid = (pl.cdiv(rows, tr), pl.cdiv(B, bt))

    out = pl.pallas_call(
        _pos_enc_kernel,
        out_shape=jax.ShapeDtypeStruct((B, rows, width), x.dtype),
        grid_spec=pltpu.PrefetchScalarGridSpec(
            num_scalar_prefetch=0,
            grid=grid,
            in_specs=[
                pl.BlockSpec((bt, tr, width), lambda t, b: (b, t, 0)),
                pl.BlockSpec((tr, width), lambda t, b: (t, 0)),
            ],
            out_specs=pl.BlockSpec((bt, tr, width), lambda t, b: (b, t, 0)),
        ),
        compiler_params=pltpu.CompilerParams(
            dimension_semantics=("parallel", "parallel"),
            vmem_limit_bytes=vmem_limit,
        ),
    )(x_view, pe_view)

    return out.reshape(B, S, D)


def positional_encoding_ref(x):
    """Pure-JAX mirror of the PyTorch module (raw-d exponent, sin/cos select)."""
    _, S, D = x.shape
    pos = jnp.arange(S, dtype=jnp.float32)[:, None]
    d_f = jnp.arange(D, dtype=jnp.float32)[None, :]
    d_i = jnp.arange(D)[None, :]
    angle = pos / jnp.power(jnp.float32(10000.0), 2.0 * d_f / D)
    pe = jnp.where(d_i % 2 == 0, jnp.sin(angle), jnp.cos(angle))
    return (x.astype(jnp.float32) + pe[None]).astype(x.dtype)


if __name__ == "__main__":
    key = jax.random.PRNGKey(0)

    # (mb, sequence_length, dimension) -- shapes consistent with the module.
    cases = [
        ((16, 8, 32), jnp.float32),    # module's mb=16; D<128 -> flattened lane-dense view, batch fused
        ((2, 16, 128), jnp.float32),   # D already a multiple of 128
        ((2, 8, 32), jnp.bfloat16),    # non-f32 activations (cast-on-store path)
        ((2, 4096, 256), jnp.float32), # larger slab -> row-tiled (tr < rows) path
    ]
    for (B, S, D), dtype in cases:
        key, sub = jax.random.split(key)
        x = jax.random.normal(sub, (B, S, D), dtype=jnp.float32).astype(dtype)

        out = positional_encoding(x)
        jax.block_until_ready(out)

        ref = positional_encoding_ref(x)
        assert out.shape == (B, S, D)
        assert out.dtype == dtype
        tol = 1e-5 if dtype == jnp.float32 else 2e-2
        assert jnp.allclose(
            out.astype(jnp.float32), ref.astype(jnp.float32), atol=tol, rtol=tol
        ), (B, S, D, dtype)

    print("KERNEL_OK")
</pallas_src>

<mosaic_0001>
module attributes {stable_mosaic.version = 11 : i64} {
  func.func @_pos_enc_kernel(%arg0: i32, %arg1: i32, %arg2: memref<8x2x128xf32, #tpu.memory_space<vmem>>, %arg3: memref<2x128xf32, #tpu.memory_space<vmem>>, %arg4: memref<8x2x128xf32, #tpu.memory_space<vmem>>) attributes {dimension_semantics = [#tpu.dimension_semantics<parallel>, #tpu.dimension_semantics<parallel>], iteration_bounds = array<i64: 1, 2>, scalar_prefetch = 0 : i64, scratch_operands = 0 : i64, tpu.core_type = #tpu.core_type<tc>, window_params = [{transform_indices = @transform_0, window_bounds = array<i64: 8, 2, 128>}, {transform_indices = @transform_1, window_bounds = array<i64: 2, 128>}, {transform_indices = @transform_2, window_bounds = array<i64: 8, 2, 128>}]} {
    %c0 = arith.constant 0 : index
    %c0_0 = arith.constant 0 : index
    %c0_1 = arith.constant 0 : index
    %0 = vector.load %arg2[%c0, %c0_0, %c0_1] : memref<8x2x128xf32, #tpu.memory_space<vmem>>, vector<8x2x128xf32>
    %c0_2 = arith.constant 0 : index
    %c0_3 = arith.constant 0 : index
    %1 = vector.load %arg3[%c0_2, %c0_3] : memref<2x128xf32, #tpu.memory_space<vmem>>, vector<2x128xf32>
    %2 = vector.shape_cast %1 : vector<2x128xf32> to vector<1x2x128xf32>
    %3 = vector.broadcast %2 : vector<1x2x128xf32> to vector<8x2x128xf32>
    %4 = arith.addf %0, %3 : vector<8x2x128xf32>
    %c0_4 = arith.constant 0 : index
    %c0_5 = arith.constant 0 : index
    %c0_6 = arith.constant 0 : index
    %5 = vector.load %arg4[%c0_4, %c0_5, %c0_6] : memref<8x2x128xf32, #tpu.memory_space<vmem>>, vector<8x2x128xf32>
    tpu.vector_store %arg4[%c0_4, %c0_5, %c0_6], %4 {strides = array<i32>} : memref<8x2x128xf32, #tpu.memory_space<vmem>>, vector<8x2x128xf32>,
    return
  }
  func.func @transform_0(%arg0: i32, %arg1: i32) -> (i32, i32, i32) {
    %c0_i32 = arith.constant 0 : i32
    %c0_i32_0 = arith.constant 0 : i32
    return %arg1, %arg0, %c0_i32 : i32, i32, i32
  }
  func.func @transform_1(%arg0: i32, %arg1: i32) -> (i32, i32) {
    %c0_i32 = arith.constant 0 : i32
    %c0_i32_0 = arith.constant 0 : i32
    return %arg0, %c0_i32 : i32, i32
  }
  func.func @transform_2(%arg0: i32, %arg1: i32) -> (i32, i32, i32) {
    %c0_i32 = arith.constant 0 : i32
    %c0_i32_0 = arith.constant 0 : i32
    return %arg1, %arg0, %c0_i32 : i32, i32, i32
  }
}

</mosaic_0001>

<llo_original>
// kernel: tpu_custom_call.1
$region0: #{tpu_custom_call.1}
  #allocation0 [shape = 'u32[]', space=smem, size = 0x4, offset = 0x4, fixed_abs, tag = 'smem constant byte address 0x4 - core index']
  #allocation1 [shape = 'u32[144,128]{1,0:T(1,128)}', space=vmem, size = 0x12000, scoped, tag = 'internal scratch']
  %s0 = inlined_call_operand.hbm [shape: f32[16,2,128], index: 0, kind: input, shape index: {}]
  %s1 = inlined_call_operand.hbm [shape: f32[2,128], index: 1, kind: input, shape index: {}]
  %s2 = inlined_call_operand.hbm [shape: f32[16,2,128], index: 2, kind: output, shape index: {}]
  %s3 = sld [smem:[#allocation0]]
  $region49: #{tpu_custom_call.1} parent=0
    _
  %s5 = ssub.s32 1, %s3
  %s6 = scalar_select 0, %s5, %s3
  $region1: #{tpu_custom_call.1} parent=0
    #allocation2 [shape = 'u8[16384]{0}', space=vmem, size = 0x4000, scoped, tag = 'input window, operand 0']
    #allocation3 [shape = 's32[2]{0}', space=sflag, size = 0x8, scoped, tag = 'scoped memory for tpu_custom_call.1']
    #allocation4 [shape = 's32[2]{0}', space=sflag, size = 0x8, scoped, tag = 'scoped memory for tpu_custom_call.1']
    #allocation5 [shape = 'u8[1024]{0}', space=vmem, size = 0x400, scoped, tag = 'input window, operand 1, single buffered']
    #allocation6 [shape = 's32[1]{0}', space=sflag, size = 0x4, scoped, tag = 'scoped memory for tpu_custom_call.1']
    #allocation7 [shape = 'u8[16384]{0}', space=vmem, size = 0x4000, scoped, tag = 'output window, operand 0']
    %7 = vsyncpa [#allocation3], 0
    %s8 = scalar_lea.sflag [#allocation3], 1
    %9 = vsyncpa %s8, 0
    %10 = vsyncpa [#allocation6], 0
    %11 = vsyncpa [#allocation4], 0
    %s12 = scalar_lea.sflag [#allocation4], 1
    %13 = vsyncpa %s12, 0
    loop: start=0, step=1, limit=4
    $region2: #{tpu_custom_call.1} parent=1 // loop_pre_header
      _
    $region3: #{tpu_custom_call.1} parent=1 // loop_header
      %s15 = sphi 0, %s19
      %p16 = scmp.ge.s32.totalorder %s15, 4
      %s22 = sphi 0, %s34
      %s23 = sphi 0, %s30
      %s24 = sphi 0, %s22
      %s25 = sphi 0, %s23
      %s26 = sphi 0, %s24
      %s27 = sphi 0, %s25
      %s39 = sphi 0, %s41
      %s42 = sphi 0, %s39
      %s43 = sphi 0, %s42
      %s59 = sphi 0, %s43
      %s65 = sphi 0, %s67
      %s68 = sphi 0, %s65
      %s69 = sphi 0, %s68
      %s85 = sphi 0, %s69
      %s93 = sphi 0, %s95
      %s96 = sphi 0, %s93
      %s97 = sphi 0, %s96
      %s113 = sphi 0, %s97
    $region4: #{tpu_custom_call.1} parent=1 // loop_header_branch
      %18 = sbr.rel (%p16) target = $region8
    $region5: #{tpu_custom_call.1} parent=1 // loop_body
      %s20 = ssub.s32 %s15, 1
      %s21 = ssub.s32 %s15, 2
      %s28 = sadd.s32 1, %s23
      %p29 = scmp.ge.s32.totalorder %s28, 2
      %s30 = scalar_select %p29, 0, %s28
      %s31 = sadd.s32 1, %s22
      %s32 = scalar_select %p29, %s31, %s22
      %p33 = scmp.ge.s32.totalorder %s32, 1
      %s34 = scalar_select %p33, 0, %s32
      %s35 = ssub.s32 %s23, %s30
      %s36 = ssub.s32 %s22, %s34
      %s37 = sor.u32 %s35, %s36
      %p38 = scmp.eq.s32.totalorder %s37, 0
      %s40 = sadd.s32 %s39, 1
      %s41 = scalar_select %p38, %s39, %s40
      %p44 = pneg %p38
      %p45 = scmp.eq.s32.totalorder %s15, 1
      %p46 = por %p44, %p45
      %p47 = scmp.ne.s32.totalorder %s39, %s42
      %p48 = scmp.eq.s32.totalorder %s15, 0
      %p49 = por %p47, %p48
      %p50 = scmp.ne.s32.totalorder %s39, %s42
      %p51 = scmp.eq.s32.totalorder %s20, 1
      %p52 = por %p50, %p51
      %p53 = scmp.ne.s32.totalorder %s42, %s43
      %p54 = scmp.eq.s32.totalorder %s20, 0
      %p55 = por %p53, %p54
      %p56 = scmp.ne.s32.totalorder %s42, %s43
      %p57 = scmp.eq.s32.totalorder %s21, 1
      %p58 = por %p56, %p57
      %p60 = scmp.ne.s32.totalorder %s43, %s59
      %p61 = scmp.eq.s32.totalorder %s21, 0
      %p62 = por %p60, %p61
      %s63 = ssub.s32 %s22, %s34
      %p64 = scmp.eq.s32.totalorder %s63, 0
      %s66 = sadd.s32 %s65, 1
      %s67 = scalar_select %p64, %s65, %s66
      %p70 = pneg %p64
      %p71 = scmp.eq.s32.totalorder %s15, 1
      %p72 = por %p70, %p71
      %p73 = scmp.ne.s32.totalorder %s65, %s68
      %p74 = scmp.eq.s32.totalorder %s15, 0
      %p75 = por %p73, %p74
      %p76 = scmp.ne.s32.totalorder %s65, %s68
      %p77 = scmp.eq.s32.totalorder %s20, 1
      %p78 = por %p76, %p77
      %p79 = scmp.ne.s32.totalorder %s68, %s69
      %p80 = scmp.eq.s32.totalorder %s20, 0
      %p81 = por %p79, %p80
      %p82 = scmp.ne.s32.totalorder %s68, %s69
      %p83 = scmp.eq.s32.totalorder %s21, 1
      %p84 = por %p82, %p83
      %p86 = scmp.ne.s32.totalorder %s69, %s85
      %p87 = scmp.eq.s32.totalorder %s21, 0
      %p88 = por %p86, %p87
      %s89 = ssub.s32 %s23, %s30
      %s90 = ssub.s32 %s22, %s34
      %s91 = sor.u32 %s89, %s90
      %p92 = scmp.eq.s32.totalorder %s91, 0
      %s94 = sadd.s32 %s93, 1
      %s95 = scalar_select %p92, %s93, %s94
      %p98 = pneg %p92
      %p99 = scmp.eq.s32.totalorder %s15, 1
      %p100 = por %p98, %p99
      %p101 = scmp.ne.s32.totalorder %s93, %s96
      %p102 = scmp.eq.s32.totalorder %s15, 0
      %p103 = por %p101, %p102
      %p104 = scmp.ne.s32.totalorder %s93, %s96
      %p105 = scmp.eq.s32.totalorder %s20, 1
      %p106 = por %p104, %p105
      %p107 = scmp.ne.s32.totalorder %s96, %s97
      %p108 = scmp.eq.s32.totalorder %s20, 0
      %p109 = por %p107, %p108
      %p110 = scmp.ne.s32.totalorder %s96, %s97
      %p111 = scmp.eq.s32.totalorder %s21, 1
      %p112 = por %p110, %p111
      %p114 = scmp.ne.s32.totalorder %s97, %s113
      %p115 = scmp.eq.s32.totalorder %s21, 0
      %p116 = por %p114, %p115
      %p117 = scmp.le.s32.totalorder 1, %s15
      %p118 = scmp.lt.s32.totalorder %s15, 3
      %p119 = pnand %p117, %p118
      %p120 = pneg %p119
      // Predicated region
      $region9: #{tpu_custom_call.1} parent=5 // pred_check
        _
      $region10: #{tpu_custom_call.1} parent=5 // pred_check_branch
        %122 = sbr.rel (%p119) target = $region12
      $region11: #{tpu_custom_call.1} parent=5 // pred_region
        %s123 = ssub.s32 %s15, 1
        // Predicated region
        $region13: #{tpu_custom_call.1} parent=11 // pred_check
          %p124 = pneg %p81
        $region14: #{tpu_custom_call.1} parent=11 // pred_check_branch
          %126 = sbr.rel (%p124) target = $region16
        $region15: #{tpu_custom_call.1} parent=11 // pred_region
          %s128 = ssub.s32 32, 32
          %129 = vsyncadd [#allocation6], %s128
          %s130 = smul.addr %s24, 32
          %s131 = scalar_lea.hbm %s1, %s130
          %s133 = sshll.u32 [#allocation5], 4
          %s134 = int_to_ptr.vmem [resolvable:$true] %s133
          %136 = dma.hbm_to_vmem [thread:$0]  %s131, 32, %s134, [#allocation6]
        $region16: #{tpu_custom_call.1} parent=11 // pred_fallthru
          _
      $region12: #{tpu_custom_call.1} parent=5 // pred_fallthru
        _
      %p137 = scmp.lt.s32.totalorder %s15, 2
      // Predicated region
      $region17: #{tpu_custom_call.1} parent=5 // pred_check
        %p138 = pneg %p137
      $region18: #{tpu_custom_call.1} parent=5 // pred_check_branch
        %140 = sbr.rel (%p138) target = $region20
      $region19: #{tpu_custom_call.1} parent=5 // pred_region
        // Predicated region
        $region21: #{tpu_custom_call.1} parent=19 // pred_check
          %p141 = pneg %p49
        $region22: #{tpu_custom_call.1} parent=19 // pred_check_branch
          %143 = sbr.rel (%p141) target = $region24
        $region23: #{tpu_custom_call.1} parent=19 // pred_region
          %s144 = sand.u32 %s39, 1
          %s145 = scalar_lea.sflag [#allocation3], %s144
          %s146 = sand.u32 %s39, 1
          %s147 = smul.addr %s146, 16
          %s148 = scalar_lea.vmem [#allocation2], %s147
          %s149 = smul.u32 8, %s23
          %s151 = ssub.s32 256, 256
          %152 = vsyncadd %s145, %s151
          %s153 = sadd.s32 %s22, %s149
          %s154 = smul.addr %s153, 32
          %s155 = scalar_lea.hbm %s0, %s154
          %s156 = sshll.u32 %s148, 4
          %s157 = int_to_ptr.vmem [resolvable:$true] %s156
          %162 = dma.hbm_to_vmem [thread:$0]  %s155, 256, %s157, %s145, 32, 32, 2
        $region24: #{tpu_custom_call.1} parent=19 // pred_fallthru
          _
      $region20: #{tpu_custom_call.1} parent=5 // pred_fallthru
        _
      %p163 = scmp.le.s32.totalorder 1, %s15
      %p164 = scmp.lt.s32.totalorder %s15, 3
      %p165 = pnand %p163, %p164
      %p166 = pneg %p165
      // Predicated region
      $region25: #{tpu_custom_call.1} parent=5 // pred_check
        _
      $region26: #{tpu_custom_call.1} parent=5 // pred_check_branch
        %168 = sbr.rel (%p165) target = $region28
      $region27: #{tpu_custom_call.1} parent=5 // pred_region
        %s169 = ssub.s32 %s15, 1
        %s170 = sand.u32 %s42, 1
        %s171 = scalar_lea.sflag [#allocation3], %s170
        %s172 = sand.u32 %s42, 1
        %s173 = smul.addr %s172, 16
        %s174 = scalar_lea.vmem [#allocation2], %s173
        // Predicated region
        $region29: #{tpu_custom_call.1} parent=27 // pred_check
          %p175 = pneg %p55
        $region30: #{tpu_custom_call.1} parent=27 // pred_check_branch
          %177 = sbr.rel (%p175) target = $region32
        $region31: #{tpu_custom_call.1} parent=27 // pred_region
          %178 = dma.done %s171, 256
        $region32: #{tpu_custom_call.1} parent=27 // pred_fallthru
          _
        // Predicated region
        $region33: #{tpu_custom_call.1} parent=27 // pred_check
          %p179 = pneg %p81
        $region34: #{tpu_custom_call.1} parent=27 // pred_check_branch
          %181 = sbr.rel (%p179) target = $region36
        $region35: #{tpu_custom_call.1} parent=27 // pred_region
          %182 = dma.done [#allocation6], 32
        $region36: #{tpu_custom_call.1} parent=27 // pred_fallthru
          _
        %s183 = sand.u32 %s42, 1
        %s184 = scalar_lea.sflag [#allocation3], %s183
        %s185 = sand.u32 %s42, 1
        %s186 = smul.addr %s185, 16
        %s187 = scalar_lea.vmem [#allocation2], %s186
        %p188 = pneg %p55
        %p189 = pneg %p52
        %p190 = pneg %p81
        %p191 = pneg %p78
        %p192 = pneg %p109
        %p193 = pneg %p106
        %s194 = sand.u32 %s96, 1
        %s195 = scalar_lea.sflag [#allocation4], %s194
        %s196 = sand.u32 %s96, 1
        %s197 = smul.addr %s196, 16
        %s198 = scalar_lea.vmem [#allocation7], %s197
        %s199 = smul.u32 8, %s25
        %s200 = smul.u32 8, %s25
        %v201 = vld [vmem:[%s174] sm:$0x3]
        %v202 = vld [vmem:[%s174 + $0x2] sm:$0x3]
        %v203 = vld [vmem:[%s174 + $0x4] sm:$0x3]
        %v204 = vld [vmem:[%s174 + $0x6] sm:$0x3]
        %v205 = vld [vmem:[%s174 + $0x8] sm:$0x3]
        %v206 = vld [vmem:[%s174 + $0xa] sm:$0x3]
        %v207 = vld [vmem:[%s174 + $0xc] sm:$0x3]
        %v208 = vld [vmem:[%s174 + $0xe] sm:$0x3]
        %v209 = vld [vmem:[#allocation5] sm:$0x3]
        %v210 = vadd.f32 %v201, %v209
        %v211 = vadd.f32 %v202, %v209
        %v212 = vadd.f32 %v203, %v209
        %v213 = vadd.f32 %v204, %v209
        %v214 = vadd.f32 %v205, %v209
        %v215 = vadd.f32 %v206, %v209
        %v216 = vadd.f32 %v207, %v209
        %v217 = vadd.f32 %v208, %v209
        %218 = vst [vmem:[%s198] sm:$0x3] %v210
        %219 = vst [vmem:[%s198 + $0x2] sm:$0x3] %v211
        %220 = vst [vmem:[%s198 + $0x4] sm:$0x3] %v212
        %221 = vst [vmem:[%s198 + $0x6] sm:$0x3] %v213
        %222 = vst [vmem:[%s198 + $0x8] sm:$0x3] %v214
        %223 = vst [vmem:[%s198 + $0xa] sm:$0x3] %v215
        %224 = vst [vmem:[%s198 + $0xc] sm:$0x3] %v216
        %225 = vst [vmem:[%s198 + $0xe] sm:$0x3] %v217
        %s226 = sand.u32 %s96, 1
        %s227 = scalar_lea.sflag [#allocation4], %s226
        %s228 = sand.u32 %s96, 1
        %s229 = smul.addr %s228, 16
        %s230 = scalar_lea.vmem [#allocation7], %s229
        // Predicated region
        $region37: #{tpu_custom_call.1} parent=27 // pred_check
          %p231 = pneg %p106
        $region38: #{tpu_custom_call.1} parent=27 // pred_check_branch
          %233 = sbr.rel (%p231) target = $region40
        $region39: #{tpu_custom_call.1} parent=27 // pred_region
          %s234 = smul.u32 8, %s25
          %s236 = ssub.s32 256, 256
          %237 = vsyncadd %s227, %s236
          %s238 = sadd.s32 %s24, %s234
          %s239 = smul.addr %s238, 32
          %s240 = scalar_lea.hbm %s2, %s239
          %s241 = sshll.u32 %s230, 4
          %s242 = int_to_ptr.vmem [resolvable:$true] %s241
          %247 = dma.vmem_to_hbm [thread:$0]  %s242, 256, %s240, %s227, 32, 32, 2
        $region40: #{tpu_custom_call.1} parent=27 // pred_fallthru
          _
      $region28: #{tpu_custom_call.1} parent=5 // pred_fallthru
        _
      %p248 = scmp.le.s32.totalorder 2, %s15
      // Predicated region
      $region41: #{tpu_custom_call.1} parent=5 // pred_check
        %p249 = pneg %p248
      $region42: #{tpu_custom_call.1} parent=5 // pred_check_branch
        %251 = sbr.rel (%p249) target = $region44
      $region43: #{tpu_custom_call.1} parent=5 // pred_region
        %s252 = ssub.s32 %s15, 2
        // Predicated region
        $region45: #{tpu_custom_call.1} parent=43 // pred_check
          %p253 = pneg %p112
        $region46: #{tpu_custom_call.1} parent=43 // pred_check_branch
          %255 = sbr.rel (%p253) target = $region48
        $region47: #{tpu_custom_call.1} parent=43 // pred_region
          %s256 = sand.u32 %s97, 1
          %s257 = scalar_lea.sflag [#allocation4], %s256
          %s258 = sand.u32 %s97, 1
          %s259 = smul.addr %s258, 16
          %s260 = scalar_lea.vmem [#allocation7], %s259
          %261 = dma.done %s257, 256
        $region48: #{tpu_custom_call.1} parent=43 // pred_fallthru
          _
      $region44: #{tpu_custom_call.1} parent=5 // pred_fallthru
        _
    $region6: #{tpu_custom_call.1} parent=1 // loop_footer
      %s19 = sadd.s32 1, %s15
    $region7: #{tpu_custom_call.1} parent=1 // loop_footer_branch
      %14 = sbr.rel target = $region3
    $region8: #{tpu_custom_call.1} parent=1 // loop_exit
      _
    %262 = vsyncpa [#allocation3], 1
    %s263 = scalar_lea.sflag [#allocation3], 1
    %264 = vsyncpa %s263, 1
    %265 = vsyncpa [#allocation6], 1
    %266 = vsyncpa [#allocation4], 1
    %s267 = scalar_lea.sflag [#allocation4], 1
    %268 = vsyncpa %s267, 1

</llo_original>
